<compile_context>
chip_gen: v7x
topology: tpu7x:2x2x1
jax: 0.10.0
libtpu: 0.0.40
codegen_flags: <defaults>
</compile_context>

<pallas_src>
import functools

import jax
import jax.numpy as jnp
from jax.experimental import pallas as pl
from jax.experimental.pallas import tpu as pltpu

NEG_SLOPE = 0.01      # torch.nn.LeakyReLU default
BN_EPS = 1e-5         # torch.nn.BatchNorm2d default


def _leaky_relu(x):
    return jnp.where(x >= 0, x, NEG_SLOPE * x)


def _sigmoid(x):
    # Numerically stable logistic built only from exp/where/div (always lowers).
    e = jnp.exp(-jnp.abs(x))
    return jnp.where(x >= 0, 1.0 / (1.0 + e), e / (1.0 + e))


# ---------------------------------------------------------------------------
# Generation-aware budgets.  Pass 2 holds x-in + out double-buffered
# (~4x block bytes), which fits comfortably under these limits.
# ---------------------------------------------------------------------------
def _vmem_budgets():
    cap = None
    try:
        cap = getattr(pltpu.get_tpu_info(), "vmem_capacity_bytes", None)
    except Exception:
        cap = None
    if not cap:
        return 32 << 20, 2 << 20                 # unknown: conservative
    if cap >= (100 << 20):                       # v5e / v6e (128 MiB physical)
        return 96 << 20, 8 << 20
    return min(48 << 20, (cap * 3) // 4), 4 << 20  # v7x-class (64 MiB physical)


def _pick_channel_tile(c, bytes_per_channel, budget):
    """Largest channel tile dividing C that is a multiple of 8 (or C itself)
    and fits `budget` bytes for a (1, c_tile, HW) block.  None -> no fit."""
    cands = [d for d in range(8, c, 8) if c % d == 0] + [c]
    best = None
    for d in cands:
        if d * bytes_per_channel <= budget and (best is None or d > best):
            best = d
    return best


def _pick_hw_tile(hw_padded, bytes_per_col, budget):
    """Largest multiple-of-128 tile dividing hw_padded within budget (>=128)."""
    best = 128
    for t in range(128, hw_padded + 1, 128):
        if hw_padded % t == 0 and t * bytes_per_col <= budget:
            best = t
    return best


def _pad_hw(x):
    """Zero-pad the flattened spatial axis up to a multiple of 128.  Exact for
    sum / sum^2 statistics (padding is zero); the apply pass slices it off."""
    n, c, hw = x.shape
    hwp = ((hw + 127) // 128) * 128
    if hwp == hw:
        return x, hw
    return jnp.pad(x, ((0, 0), (0, 0), (0, hwp - hw))), hwp


# ---------------------------------------------------------------------------
# Fused single-shot kernel: whole tensor resident in VMEM -> 1 read + 1 write.
# All per-(n,c) math keeps a trailing singleton lane dim (C on sublanes) so no
# 2D<->3D relayouts are needed.
# ---------------------------------------------------------------------------
def _fused_kernel(x_ref, w1_ref, b1_ref, w2t_ref, b2_ref, gamma_ref, beta_ref,
                  o_ref, *, hw):
    # x: (N, C, HW); w1: (Cr, C, 1); b1: (Cr, 1, 1); w2t: (Cr, C, 1);
    # b2 / gamma / beta: (1, C, 1).
    x = x_ref[...]
    n = x.shape[0]
    cr = w1_ref.shape[0]

    sum_x = jnp.sum(x, axis=2, keepdims=True)              # (N, C, 1)
    sum_x2 = jnp.sum(x * x, axis=2, keepdims=True)          # (N, C, 1)
    squeeze = sum_x * jnp.float32(1.0 / hw)                  # (N, C, 1)

    # SE excitation MLP.  Cr = C // 8 is tiny and this runs once per layer; a
    # statically unrolled loop of VPU broadcasts + sublane reductions is not
    # on the critical path (the kernel is HBM-bound on streaming x).
    logits = b2_ref[...]                                     # (1, C, 1)
    for j in range(cr):
        hj = jnp.sum(squeeze * w1_ref[j:j + 1], axis=1, keepdims=True)
        hj = hj + b1_ref[j:j + 1]                            # (N, 1, 1)
        hj = jnp.where(hj >= 0, hj, NEG_SLOPE * hj)
        logits = logits + hj * w2t_ref[j:j + 1]              # (N, C, 1)
    s = _sigmoid(logits)                                     # (N, C, 1)

    # Fold SE scale + training-mode BatchNorm2d into a per-(n,c) affine:
    #   y = s*x  =>  sum_y = s*sum_x , sum_y2 = s^2*sum_x2
    m = jnp.float32(n * hw)
    mean_c = jnp.sum(s * sum_x, axis=0, keepdims=True) / m           # (1, C, 1)
    ex2_c = jnp.sum((s * s) * sum_x2, axis=0, keepdims=True) / m     # (1, C, 1)
    var_c = jnp.maximum(ex2_c - mean_c * mean_c, 0.0)                # biased var
    g_inv = gamma_ref[...] * jax.lax.rsqrt(var_c + BN_EPS)           # (1, C, 1)
    a = s * g_inv                                                    # (N, C, 1)
    b = beta_ref[...] - mean_c * g_inv                               # (1, C, 1)

    y = x * a + b
    o_ref[...] = jnp.where(y >= 0, y, NEG_SLOPE * y)


# ---------------------------------------------------------------------------
# Pass 1 kernels: per-(n, c) sum and sum^2.
# ---------------------------------------------------------------------------
def _stats_kernel_cpar(x_ref, sx_ref, sx2_ref):
    # Preferred path: one contiguous (1, c_tile, HW) block per grid step, both
    # grid axes "parallel" (shards across v7x's two TensorCores).
    x = x_ref[...]                                           # (1, ct, HW)
    sx_ref[...] = jnp.sum(x, axis=2, keepdims=True)          # (1, ct, 1)
    sx2_ref[...] = jnp.sum(x * x, axis=2, keepdims=True)


def _stats_kernel_hw(x_ref, sx_ref, sx2_ref):
    # Fallback: HW-tiled reduction; outputs stay VMEM-resident (constant index
    # map across the single "arbitrary" grid axis) and accumulate in place.
    @pl.when(pl.program_id(0) == 0)
    def _init():
        sx_ref[...] = jnp.zeros_like(sx_ref)
        sx2_ref[...] = jnp.zeros_like(sx2_ref)

    x = x_ref[...]                                           # (N, C, t)
    sx_ref[...] += jnp.sum(x, axis=2, keepdims=True)
    sx2_ref[...] += jnp.sum(x * x, axis=2, keepdims=True)


# ---------------------------------------------------------------------------
# Pass 2 kernel: out = leaky_relu(a * x + b)  (kept minimal; HBM-bound).
# ---------------------------------------------------------------------------
def _apply_kernel(x_ref, scale_ref, bias_ref, o_ref):
    y = x_ref[...] * scale_ref[...] + bias_ref[...]
    o_ref[...] = jnp.where(y >= 0, y, NEG_SLOPE * y)


# ---------------------------------------------------------------------------
# Host-side pieces.
# ---------------------------------------------------------------------------
def _compute_stats(x, vmem_limit, tile_budget):
    n, c, hw = x.shape
    ct = _pick_channel_tile(c, hw * 4, tile_budget)
    if ct is not None:
        sx, sx2 = pl.pallas_call(
            _stats_kernel_cpar,
            out_shape=(jax.ShapeDtypeStruct((n, c, 1), jnp.float32),
                       jax.ShapeDtypeStruct((n, c, 1), jnp.float32)),
            grid_spec=pltpu.PrefetchScalarGridSpec(
                num_scalar_prefetch=0,
                grid=(n, c // ct),
                in_specs=[pl.BlockSpec((1, ct, hw), lambda i, j: (i, j, 0))],
                out_specs=(pl.BlockSpec((1, ct, 1), lambda i, j: (i, j, 0)),
                           pl.BlockSpec((1, ct, 1), lambda i, j: (i, j, 0))),
            ),
            compiler_params=pltpu.CompilerParams(
                dimension_semantics=("parallel", "parallel"),
                vmem_limit_bytes=vmem_limit,
            ),
        )(x)
        return sx[..., 0], sx2[..., 0]

    # Fallback: HW-tiled sequential reduction (only when even an 8-channel
    # full-HW block exceeds the block budget).
    xp, hwp = _pad_hw(x)
    t = _pick_hw_tile(hwp, n * c * 4, tile_budget)
    sx, sx2 = pl.pallas_call(
        _stats_kernel_hw,
        out_shape=(jax.ShapeDtypeStruct((n, c, 1), jnp.float32),
                   jax.ShapeDtypeStruct((n, c, 1), jnp.float32)),
        grid_spec=pltpu.PrefetchScalarGridSpec(
            num_scalar_prefetch=0,
            grid=(hwp // t,),
            in_specs=[pl.BlockSpec((n, c, t), lambda k: (0, 0, k))],
            out_specs=(pl.BlockSpec((n, c, 1), lambda k: (0, 0, 0)),
                       pl.BlockSpec((n, c, 1), lambda k: (0, 0, 0))),
        ),
        compiler_params=pltpu.CompilerParams(
            dimension_semantics=("arbitrary",),
            vmem_limit_bytes=vmem_limit,
        ),
    )(xp)
    return sx[..., 0], sx2[..., 0]


def _fold_se_bn(sum_x, sum_x2, params, n, hw):
    """Tiny (N, C) SE MLP + training-mode BatchNorm fold, in plain JAX."""
    w1 = params["fc1_w"].astype(jnp.float32)        # (Cr, C)
    b1 = params["fc1_b"].astype(jnp.float32)        # (Cr,)
    w2 = params["fc2_w"].astype(jnp.float32)        # (C, Cr)
    b2 = params["fc2_b"].astype(jnp.float32)        # (C,)
    gamma = params["bn_gamma"].astype(jnp.float32)  # (C,)
    beta = params["bn_beta"].astype(jnp.float32)    # (C,)

    squeeze = sum_x / hw                            # (N, C)
    h = _leaky_relu(squeeze @ w1.T + b1)            # (N, Cr)  (MXU matmul)
    s = _sigmoid(h @ w2.T + b2)                     # (N, C)

    m = n * hw
    mean_c = jnp.sum(s * sum_x, axis=0) / m                          # (C,)
    # One-pass E[y^2]-E[y]^2 in fp32 (clamped); accurate for typical activations.
    var_c = jnp.maximum(jnp.sum((s * s) * sum_x2, axis=0) / m - mean_c * mean_c, 0.0)
    g_inv = gamma * jax.lax.rsqrt(var_c + BN_EPS)                    # (C,)
    scale = s * g_inv                                                # (N, C)
    bias = beta - mean_c * g_inv                                     # (C,)
    return scale, bias


def _apply_affine(x, scale, bias, vmem_limit, tile_budget, donate_input):
    n, c, hw = x.shape
    scale3 = scale.reshape(n, c, 1).astype(jnp.float32)
    bias3 = bias.reshape(1, c, 1).astype(jnp.float32)
    alias = {0: 0} if donate_input else {}

    ct = _pick_channel_tile(c, hw * 4, tile_budget)
    if ct is not None:
        return pl.pallas_call(
            _apply_kernel,
            out_shape=jax.ShapeDtypeStruct((n, c, hw), jnp.float32),
            grid_spec=pltpu.PrefetchScalarGridSpec(
                num_scalar_prefetch=0,
                grid=(n, c // ct),
                in_specs=[pl.BlockSpec((1, ct, hw), lambda i, j: (i, j, 0)),
                          pl.BlockSpec((1, ct, 1), lambda i, j: (i, j, 0)),
                          pl.BlockSpec((1, ct, 1), lambda i, j: (0, j, 0))],
                out_specs=pl.BlockSpec((1, ct, hw), lambda i, j: (i, j, 0)),
            ),
            input_output_aliases=alias,
            compiler_params=pltpu.CompilerParams(
                dimension_semantics=("parallel", "parallel"),
                vmem_limit_bytes=vmem_limit,
            ),
        )(x, scale3, bias3)

    # Fallback: HW-tiled elementwise pass (pads HW to a multiple of 128).
    xp, hwp = _pad_hw(x)
    t = _pick_hw_tile(hwp, c * 4, tile_budget)
    out = pl.pallas_call(
        _apply_kernel,
        out_shape=jax.ShapeDtypeStruct((n, c, hwp), jnp.float32),
        grid_spec=pltpu.PrefetchScalarGridSpec(
            num_scalar_prefetch=0,
            grid=(n, hwp // t),
            in_specs=[pl.BlockSpec((1, c, t), lambda i, k: (i, 0, k)),
                      pl.BlockSpec((1, c, 1), lambda i, k: (i, 0, 0)),
                      pl.BlockSpec((1, c, 1), lambda i, k: (0, 0, 0))],
            out_specs=pl.BlockSpec((1, c, t), lambda i, k: (i, 0, k)),
        ),
        input_output_aliases=alias,
        compiler_params=pltpu.CompilerParams(
            dimension_semantics=("parallel", "parallel"),
            vmem_limit_bytes=vmem_limit,
        ),
    )(xp, scale3, bias3)
    return out[:, :, :hw] if hwp != hw else out


def channel_se_layer(x_nchw, params, *, donate_input=False,
                     max_fused_bytes=None, tile_budget=None):
    """Forward pass of ChannelSELayer.  x_nchw: (N, C, H, W)."""
    n, c, h, w = x_nchw.shape
    hw = h * w
    x = x_nchw.reshape(n, c, hw).astype(jnp.float32)

    vmem_limit, auto_budget = _vmem_budgets()
    if tile_budget is None:
        tile_budget = auto_budget
    if max_fused_bytes is None:
        # Fused kernel keeps x-in + out (plus slack) resident in VMEM.
        max_fused_bytes = max((vmem_limit - (4 << 20)) * 2 // 5, 0)

    x_bytes = n * c * hw * 4
    if x_bytes <= max_fused_bytes:
        w1 = params["fc1_w"].astype(jnp.float32)[:, :, None]        # (Cr, C, 1)
        b1 = params["fc1_b"].astype(jnp.float32)[:, None, None]     # (Cr, 1, 1)
        w2t = params["fc2_w"].T.astype(jnp.float32)[:, :, None]     # (Cr, C, 1)
        b2 = params["fc2_b"].astype(jnp.float32)[None, :, None]     # (1, C, 1)
        gamma = params["bn_gamma"].astype(jnp.float32)[None, :, None]
        beta = params["bn_beta"].astype(jnp.float32)[None, :, None]
        out = pl.pallas_call(
            functools.partial(_fused_kernel, hw=hw),
            out_shape=jax.ShapeDtypeStruct((n, c, hw), jnp.float32),
            input_output_aliases=({0: 0} if donate_input else {}),
            compiler_params=pltpu.CompilerParams(vmem_limit_bytes=vmem_limit),
        )(x, w1, b1, w2t, b2, gamma, beta)
        return out.reshape(n, c, h, w)

    sum_x, sum_x2 = _compute_stats(x, vmem_limit, tile_budget)       # (N, C) x2
    scale, bias = _fold_se_bn(sum_x, sum_x2, params, n, hw)
    out = _apply_affine(x, scale, bias, vmem_limit, tile_budget, donate_input)
    return out.reshape(n, c, h, w)


# ---------------------------------------------------------------------------
# Pure-JAX reference mirroring the PyTorch forward (training-mode BN).
# ---------------------------------------------------------------------------
def reference(x_nchw, params):
    sq = jnp.mean(x_nchw, axis=(2, 3))                               # (N, C)
    a = _leaky_relu(sq @ params["fc1_w"].T + params["fc1_b"])
    s = jax.nn.sigmoid(a @ params["fc2_w"].T + params["fc2_b"])      # (N, C)
    y = x_nchw * s[:, :, None, None]
    mean = jnp.mean(y, axis=(0, 2, 3), keepdims=True)
    var = jnp.mean((y - mean) ** 2, axis=(0, 2, 3), keepdims=True)   # biased
    y = (y - mean) * jax.lax.rsqrt(var + BN_EPS)
    y = y * params["bn_gamma"][None, :, None, None] + params["bn_beta"][None, :, None, None]
    return _leaky_relu(y)


def init_params(key, num_channels):
    cr = num_channels // 8
    k1, k2, k3, k4 = jax.random.split(key, 4)
    bound1 = 1.0 / jnp.sqrt(num_channels)
    bound2 = 1.0 / jnp.sqrt(cr)
    return {
        "fc1_w": jax.random.uniform(k1, (cr, num_channels), jnp.float32, -bound1, bound1),
        "fc1_b": jax.random.uniform(k2, (cr,), jnp.float32, -bound1, bound1),
        "fc2_w": jax.random.uniform(k3, (num_channels, cr), jnp.float32, -bound2, bound2),
        "fc2_b": jax.random.uniform(k4, (num_channels,), jnp.float32, -bound2, bound2),
        "bn_gamma": jnp.ones((num_channels,), jnp.float32),
        "bn_beta": jnp.zeros((num_channels,), jnp.float32),
    }


if __name__ == "__main__":
    key = jax.random.PRNGKey(0)
    kx, kp, kx2, kp2 = jax.random.split(key, 4)

    # Case 1: small input -> fused single-kernel path (1 read + 1 write).
    N, C, H, W = 2, 16, 16, 16          # C divisible by reduction_ratio=8
    x = jax.random.normal(kx, (N, C, H, W), jnp.float32)
    params = init_params(kp, C)
    ref = reference(x, params)

    out_fused = jax.block_until_ready(channel_se_layer(x, params))
    assert out_fused.shape == (N, C, H, W)
    assert jnp.allclose(out_fused, ref, atol=1e-4, rtol=1e-4), \
        float(jnp.max(jnp.abs(out_fused - ref)))

    # Case 2: force the two-pass channel-parallel tiled path.
    out_2p = jax.block_until_ready(channel_se_layer(x, params, max_fused_bytes=0))
    assert jnp.allclose(out_2p, ref, atol=1e-4, rtol=1e-4), \
        float(jnp.max(jnp.abs(out_2p - ref)))

    # Case 3: force the HW-tiled fallback kernels (tiny block budget).
    out_fb = jax.block_until_ready(
        channel_se_layer(x, params, max_fused_bytes=0, tile_budget=1))
    assert jnp.allclose(out_fb, ref, atol=1e-4, rtol=1e-4), \
        float(jnp.max(jnp.abs(out_fb - ref)))

    # Case 4: spatial size not a multiple of 128 -> full-extent lane blocks in
    # the preferred path and the zero-padding path in the fallback.
    N2, C2, H2, W2 = 2, 8, 10, 10
    x2 = jax.random.normal(kx2, (N2, C2, H2, W2), jnp.float32)
    params2 = init_params(kp2, C2)
    ref2 = reference(x2, params2)
    out2 = jax.block_until_ready(channel_se_layer(x2, params2, max_fused_bytes=0))
    assert jnp.allclose(out2, ref2, atol=1e-4, rtol=1e-4), \
        float(jnp.max(jnp.abs(out2 - ref2)))
    out2_fb = jax.block_until_ready(
        channel_se_layer(x2, params2, max_fused_bytes=0, tile_budget=1))
    assert jnp.allclose(out2_fb, ref2, atol=1e-4, rtol=1e-4), \
        float(jnp.max(jnp.abs(out2_fb - ref2)))

    print("KERNEL_OK")
</pallas_src>

<mosaic_0001>
module attributes {stable_mosaic.version = 11 : i64} {
  func.func @_fused_kernel(%arg0: memref<2x16x256xf32, #tpu.memory_space<vmem>>, %arg1: memref<2x16x1xf32, #tpu.memory_space<vmem>>, %arg2: memref<2x1x1xf32, #tpu.memory_space<vmem>>, %arg3: memref<2x16x1xf32, #tpu.memory_space<vmem>>, %arg4: memref<1x16x1xf32, #tpu.memory_space<vmem>>, %arg5: memref<1x16x1xf32, #tpu.memory_space<vmem>>, %arg6: memref<1x16x1xf32, #tpu.memory_space<vmem>>, %arg7: memref<2x16x256xf32, #tpu.memory_space<vmem>>) attributes {dimension_semantics = [], scalar_prefetch = 0 : i64, scratch_operands = 0 : i64, tpu.core_type = #tpu.core_type<tc>} {
    %c0 = arith.constant 0 : index
    %c0_0 = arith.constant 0 : index
    %c0_1 = arith.constant 0 : index
    %0 = vector.load %arg0[%c0, %c0_0, %c0_1] : memref<2x16x256xf32, #tpu.memory_space<vmem>>, vector<2x16x256xf32>
    %cst = arith.constant dense<0.000000e+00> : vector<2x16xf32>
    %1 = vector.multi_reduction <add>, %0, %cst [2] : vector<2x16x256xf32> to vector<2x16xf32>
    %2 = vector.shape_cast %1 : vector<2x16xf32> to vector<2x16x1xf32>
    %3 = arith.mulf %0, %0 : vector<2x16x256xf32>
    %cst_2 = arith.constant dense<0.000000e+00> : vector<2x16xf32>
    %4 = vector.multi_reduction <add>, %3, %cst_2 [2] : vector<2x16x256xf32> to vector<2x16xf32>
    %5 = vector.shape_cast %4 : vector<2x16xf32> to vector<2x16x1xf32>
    %cst_3 = arith.constant 3.906250e-03 : f32
    %6 = vector.broadcast %cst_3 : f32 to vector<2x16x1xf32>
    %7 = arith.mulf %2, %6 : vector<2x16x1xf32>
    %c0_4 = arith.constant 0 : index
    %c0_5 = arith.constant 0 : index
    %c0_6 = arith.constant 0 : index
    %8 = vector.load %arg4[%c0_4, %c0_5, %c0_6] : memref<1x16x1xf32, #tpu.memory_space<vmem>>, vector<1x16x1xf32>
    %c0_7 = arith.constant 0 : index
    %c0_8 = arith.constant 0 : index
    %c0_9 = arith.constant 0 : index
    %9 = vector.load %arg1[%c0_7, %c0_8, %c0_9] : memref<2x16x1xf32, #tpu.memory_space<vmem>>, vector<1x16x1xf32>
    %10 = vector.broadcast %9 : vector<1x16x1xf32> to vector<2x16x1xf32>
    %11 = arith.mulf %7, %10 : vector<2x16x1xf32>
    %cst_10 = arith.constant dense<0.000000e+00> : vector<2x1xf32>
    %12 = vector.multi_reduction <add>, %11, %cst_10 [1] : vector<2x16x1xf32> to vector<2x1xf32>
    %13 = vector.shape_cast %12 : vector<2x1xf32> to vector<2x1x1xf32>
    %c0_11 = arith.constant 0 : index
    %c0_12 = arith.constant 0 : index
    %c0_13 = arith.constant 0 : index
    %14 = vector.load %arg2[%c0_11, %c0_12, %c0_13] : memref<2x1x1xf32, #tpu.memory_space<vmem>>, vector<1x1x1xf32>
    %15 = vector.broadcast %14 : vector<1x1x1xf32> to vector<2x1x1xf32>
    %16 = arith.addf %13, %15 : vector<2x1x1xf32>
    %cst_14 = arith.constant 0.000000e+00 : f32
    %17 = vector.broadcast %cst_14 : f32 to vector<2x1x1xf32>
    %18 = arith.cmpf oge, %16, %17 : vector<2x1x1xf32>
    %cst_15 = arith.constant 0.00999999977 : f32
    %19 = vector.broadcast %cst_15 : f32 to vector<2x1x1xf32>
    %20 = arith.mulf %19, %16 : vector<2x1x1xf32>
    %21 = arith.select %18, %16, %20 : vector<2x1x1xi1>, vector<2x1x1xf32>
    %c0_16 = arith.constant 0 : index
    %c0_17 = arith.constant 0 : index
    %c0_18 = arith.constant 0 : index
    %22 = vector.load %arg3[%c0_16, %c0_17, %c0_18] : memref<2x16x1xf32, #tpu.memory_space<vmem>>, vector<1x16x1xf32>
    %23 = vector.broadcast %21 : vector<2x1x1xf32> to vector<2x16x1xf32>
    %24 = vector.broadcast %22 : vector<1x16x1xf32> to vector<2x16x1xf32>
    %25 = arith.mulf %23, %24 : vector<2x16x1xf32>
    %26 = vector.broadcast %8 : vector<1x16x1xf32> to vector<2x16x1xf32>
    %27 = arith.addf %26, %25 : vector<2x16x1xf32>
    %c1 = arith.constant 1 : index
    %c0_19 = arith.constant 0 : index
    %c0_20 = arith.constant 0 : index
    %28 = vector.load %arg1[%c1, %c0_19, %c0_20] : memref<2x16x1xf32, #tpu.memory_space<vmem>>, vector<1x16x1xf32>
    %29 = vector.broadcast %28 : vector<1x16x1xf32> to vector<2x16x1xf32>
    %30 = arith.mulf %7, %29 : vector<2x16x1xf32>
    %cst_21 = arith.constant dense<0.000000e+00> : vector<2x1xf32>
    %31 = vector.multi_reduction <add>, %30, %cst_21 [1] : vector<2x16x1xf32> to vector<2x1xf32>
    %32 = vector.shape_cast %31 : vector<2x1xf32> to vector<2x1x1xf32>
    %c1_22 = arith.constant 1 : index
    %c0_23 = arith.constant 0 : index
    %c0_24 = arith.constant 0 : index
    %33 = vector.load %arg2[%c1_22, %c0_23, %c0_24] : memref<2x1x1xf32, #tpu.memory_space<vmem>>, vector<1x1x1xf32>
    %34 = vector.broadcast %33 : vector<1x1x1xf32> to vector<2x1x1xf32>
    %35 = arith.addf %32, %34 : vector<2x1x1xf32>
    %cst_25 = arith.constant 0.000000e+00 : f32
    %36 = vector.broadcast %cst_25 : f32 to vector<2x1x1xf32>
    %37 = arith.cmpf oge, %35, %36 : vector<2x1x1xf32>
    %cst_26 = arith.constant 0.00999999977 : f32
    %38 = vector.broadcast %cst_26 : f32 to vector<2x1x1xf32>
    %39 = arith.mulf %38, %35 : vector<2x1x1xf32>
    %40 = arith.select %37, %35, %39 : vector<2x1x1xi1>, vector<2x1x1xf32>
    %c1_27 = arith.constant 1 : index
    %c0_28 = arith.constant 0 : index
    %c0_29 = arith.constant 0 : index
    %41 = vector.load %arg3[%c1_27, %c0_28, %c0_29] : memref<2x16x1xf32, #tpu.memory_space<vmem>>, vector<1x16x1xf32>
    %42 = vector.broadcast %40 : vector<2x1x1xf32> to vector<2x16x1xf32>
    %43 = vector.broadcast %41 : vector<1x16x1xf32> to vector<2x16x1xf32>
    %44 = arith.mulf %42, %43 : vector<2x16x1xf32>
    %45 = arith.addf %27, %44 : vector<2x16x1xf32>
    %46 = math.absf %45 : vector<2x16x1xf32>
    %cst_30 = arith.constant 0.000000e+00 : f32
    %47 = vector.broadcast %cst_30 : f32 to vector<2x16x1xf32>
    %48 = arith.subf %47, %46 : vector<2x16x1xf32>
    %49 = math.exp %48 : vector<2x16x1xf32>
    %cst_31 = arith.constant 0.000000e+00 : f32
    %50 = vector.broadcast %cst_31 : f32 to vector<2x16x1xf32>
    %51 = arith.cmpf oge, %45, %50 : vector<2x16x1xf32>
    %cst_32 = arith.constant 1.000000e+00 : f32
    %52 = vector.broadcast %cst_32 : f32 to vector<2x16x1xf32>
    %53 = arith.addf %52, %49 : vector<2x16x1xf32>
    %cst_33 = arith.constant 1.000000e+00 : f32
    %54 = vector.broadcast %cst_33 : f32 to vector<2x16x1xf32>
    %55 = arith.divf %54, %53 : vector<2x16x1xf32>
    %cst_34 = arith.constant 1.000000e+00 : f32
    %56 = vector.broadcast %cst_34 : f32 to vector<2x16x1xf32>
    %57 = arith.addf %56, %49 : vector<2x16x1xf32>
    %58 = arith.divf %49, %57 : vector<2x16x1xf32>
    %59 = arith.select %51, %55, %58 : vector<2x16x1xi1>, vector<2x16x1xf32>
    %60 = arith.mulf %59, %2 : vector<2x16x1xf32>
    %cst_35 = arith.constant dense<0.000000e+00> : vector<16x1xf32>
    %61 = vector.multi_reduction <add>, %60, %cst_35 [0] : vector<2x16x1xf32> to vector<16x1xf32>
    %62 = vector.shape_cast %61 : vector<16x1xf32> to vector<1x16x1xf32>
    %cst_36 = arith.constant 5.120000e+02 : f32
    %63 = vector.broadcast %cst_36 : f32 to vector<1x16x1xf32>
    %64 = arith.divf %62, %63 : vector<1x16x1xf32>
    %65 = arith.mulf %59, %59 : vector<2x16x1xf32>
    %66 = arith.mulf %65, %5 : vector<2x16x1xf32>
    %cst_37 = arith.constant dense<0.000000e+00> : vector<16x1xf32>
    %67 = vector.multi_reduction <add>, %66, %cst_37 [0] : vector<2x16x1xf32> to vector<16x1xf32>
    %68 = vector.shape_cast %67 : vector<16x1xf32> to vector<1x16x1xf32>
    %cst_38 = arith.constant 5.120000e+02 : f32
    %69 = vector.broadcast %cst_38 : f32 to vector<1x16x1xf32>
    %70 = arith.divf %68, %69 : vector<1x16x1xf32>
    %71 = arith.mulf %64, %64 : vector<1x16x1xf32>
    %72 = arith.subf %70, %71 : vector<1x16x1xf32>
    %cst_39 = arith.constant 0.000000e+00 : f32
    %73 = vector.broadcast %cst_39 : f32 to vector<1x16x1xf32>
    %74 = arith.maximumf %72, %73 : vector<1x16x1xf32>
    %c0_40 = arith.constant 0 : index
    %c0_41 = arith.constant 0 : index
    %c0_42 = arith.constant 0 : index
    %75 = vector.load %arg5[%c0_40, %c0_41, %c0_42] : memref<1x16x1xf32, #tpu.memory_space<vmem>>, vector<1x16x1xf32>
    %cst_43 = arith.constant 9.99999974E-6 : f32
    %76 = vector.broadcast %cst_43 : f32 to vector<1x16x1xf32>
    %77 = arith.addf %74, %76 : vector<1x16x1xf32>
    %78 = math.rsqrt %77 : vector<1x16x1xf32>
    %79 = arith.mulf %75, %78 : vector<1x16x1xf32>
    %80 = vector.broadcast %79 : vector<1x16x1xf32> to vector<2x16x1xf32>
    %81 = arith.mulf %59, %80 : vector<2x16x1xf32>
    %c0_44 = arith.constant 0 : index
    %c0_45 = arith.constant 0 : index
    %c0_46 = arith.constant 0 : index
    %82 = vector.load %arg6[%c0_44, %c0_45, %c0_46] : memref<1x16x1xf32, #tpu.memory_space<vmem>>, vector<1x16x1xf32>
    %83 = arith.mulf %64, %79 : vector<1x16x1xf32>
    %84 = arith.subf %82, %83 : vector<1x16x1xf32>
    %85 = vector.broadcast %81 : vector<2x16x1xf32> to vector<2x16x256xf32>
    %86 = arith.mulf %0, %85 : vector<2x16x256xf32>
    %87 = vector.broadcast %84 : vector<1x16x1xf32> to vector<2x16x256xf32>
    %88 = arith.addf %86, %87 : vector<2x16x256xf32>
    %cst_47 = arith.constant 0.000000e+00 : f32
    %89 = vector.broadcast %cst_47 : f32 to vector<2x16x256xf32>
    %90 = arith.cmpf oge, %88, %89 : vector<2x16x256xf32>
    %cst_48 = arith.constant 0.00999999977 : f32
    %91 = vector.broadcast %cst_48 : f32 to vector<2x16x256xf32>
    %92 = arith.mulf %91, %88 : vector<2x16x256xf32>
    %93 = arith.select %90, %88, %92 : vector<2x16x256xi1>, vector<2x16x256xf32>
    %c0_49 = arith.constant 0 : index
    %c0_50 = arith.constant 0 : index
    %c0_51 = arith.constant 0 : index
    %94 = vector.load %arg7[%c0_49, %c0_50, %c0_51] : memref<2x16x256xf32, #tpu.memory_space<vmem>>, vector<2x16x256xf32>
    tpu.vector_store %arg7[%c0_49, %c0_50, %c0_51], %93 {strides = array<i32>} : memref<2x16x256xf32, #tpu.memory_space<vmem>>, vector<2x16x256xf32>,
    return
  }
}

</mosaic_0001>

<llo_original>
// kernel: tpu_custom_call.1
$region0: #{tpu_custom_call.1}
  #allocation0 [shape = 'u32[]', space=smem, size = 0x4, offset = 0x4, fixed_abs, tag = 'smem constant byte address 0x4 - core index']
  #allocation1 [shape = 'u32[144,128]{1,0:T(1,128)}', space=vmem, size = 0x12000, scoped, tag = 'internal scratch']
  %s0 = inlined_call_operand.vmem [shape: f32[2,16,256], index: 0, kind: input, shape index: {}]
  %s1 = inlined_call_operand.vmem [shape: f32[2,16,1], index: 1, kind: input, shape index: {}]
  %s2 = inlined_call_operand.vmem [shape: f32[2,1,1], index: 2, kind: input, shape index: {}]
  %s3 = inlined_call_operand.vmem [shape: f32[2,16,1], index: 3, kind: input, shape index: {}]
  %s4 = inlined_call_operand.vmem [shape: f32[1,16,1], index: 4, kind: input, shape index: {}]
  %s5 = inlined_call_operand.vmem [shape: f32[1,16,1], index: 5, kind: input, shape index: {}]
  %s6 = inlined_call_operand.vmem [shape: f32[1,16,1], index: 6, kind: input, shape index: {}]
  %s7 = inlined_call_operand.hbm [shape: f32[2,16,256], index: 7, kind: output, shape index: {}]
  %s8 = sld [smem:[#allocation0]]
  $region38: #{tpu_custom_call.1} parent=0
    _
  %s10 = ssub.s32 1, %s8
  %s11 = scalar_select 0, %s10, %s8
  $region1: #{tpu_custom_call.1} parent=0
    #allocation2 [shape = 'u8[32768]{0}', space=vmem, size = 0x8000, scoped, tag = 'output window, operand 0, single buffered']
    #allocation3 [shape = 's32[1]{0}', space=sflag, size = 0x4, scoped, tag = 'scoped memory for tpu_custom_call.1']
    %12 = vsyncpa [#allocation3], 0
    // Predicated region
    $region2: #{tpu_custom_call.1} parent=1 // pred_check
      _
    $region3: #{tpu_custom_call.1} parent=1 // pred_check_branch
      %14 = sbr.rel (0) target = $region5
    $region4: #{tpu_custom_call.1} parent=1 // pred_region
      _
    $region5: #{tpu_custom_call.1} parent=1 // pred_fallthru
      _
    // Predicated region
    $region6: #{tpu_custom_call.1} parent=1 // pred_check
      _
    $region7: #{tpu_custom_call.1} parent=1 // pred_check_branch
      %16 = sbr.rel (0) target = $region9
    $region8: #{tpu_custom_call.1} parent=1 // pred_region
      _
    $region9: #{tpu_custom_call.1} parent=1 // pred_fallthru
      _
    // Predicated region
    $region10: #{tpu_custom_call.1} parent=1 // pred_check
      _
    $region11: #{tpu_custom_call.1} parent=1 // pred_check_branch
      %18 = sbr.rel (0) target = $region13
    $region12: #{tpu_custom_call.1} parent=1 // pred_region
      _
    $region13: #{tpu_custom_call.1} parent=1 // pred_fallthru
      _
    // Predicated region
    $region14: #{tpu_custom_call.1} parent=1 // pred_check
      _
    $region15: #{tpu_custom_call.1} parent=1 // pred_check_branch
      %20 = sbr.rel (0) target = $region17
    $region16: #{tpu_custom_call.1} parent=1 // pred_region
      _
    $region17: #{tpu_custom_call.1} parent=1 // pred_fallthru
      _
    // Predicated region
    $region18: #{tpu_custom_call.1} parent=1 // pred_check
      _
    $region19: #{tpu_custom_call.1} parent=1 // pred_check_branch
      %22 = sbr.rel (0) target = $region21
    $region20: #{tpu_custom_call.1} parent=1 // pred_region
      _
    $region21: #{tpu_custom_call.1} parent=1 // pred_fallthru
      _
    // Predicated region
    $region22: #{tpu_custom_call.1} parent=1 // pred_check
      _
    $region23: #{tpu_custom_call.1} parent=1 // pred_check_branch
      %24 = sbr.rel (0) target = $region25
    $region24: #{tpu_custom_call.1} parent=1 // pred_region
      _
    $region25: #{tpu_custom_call.1} parent=1 // pred_fallthru
      _
    // Predicated region
    $region26: #{tpu_custom_call.1} parent=1 // pred_check
      _
    $region27: #{tpu_custom_call.1} parent=1 // pred_check_branch
      %26 = sbr.rel (0) target = $region29
    $region28: #{tpu_custom_call.1} parent=1 // pred_region
      _
    $region29: #{tpu_custom_call.1} parent=1 // pred_fallthru
      _
    %v27 = vld [vmem:[%s0] sm:$0xff]
    %v28 = vld [vmem:[%s0 + $0x8] sm:$0xff]
    %v29 = vld [vmem:[%s0 + $0x10] sm:$0xff]
    %v30 = vld [vmem:[%s0 + $0x18] sm:$0xff]
    %v31 = vld [vmem:[%s0 + $0x20] sm:$0xff]
    %v32 = vld [vmem:[%s0 + $0x28] sm:$0xff]
    %v33 = vld [vmem:[%s0 + $0x30] sm:$0xff]
    %v34 = vld [vmem:[%s0 + $0x38] sm:$0xff]
    %v35 = vadd.f32 %v27, %v28
    %36 = vadd.xlane.f32.xlu0 %v35
    %v37 = vpop.xlane.xlu0 %36
    %v38 = vadd.f32 %v29, %v30
    %39 = vadd.xlane.f32.xlu0 %v38
    %v40 = vpop.xlane.xlu0 %39
    %v41 = vadd.f32 %v31, %v32
    %42 = vadd.xlane.f32.xlu0 %v41
    %v43 = vpop.xlane.xlu0 %42
    %v44 = vadd.f32 %v33, %v34
    %45 = vadd.xlane.f32.xlu0 %v44
    %v46 = vpop.xlane.xlu0 %45
    %v47 = vmul.f32 %v27, %v27
    %v48 = vmul.f32 %v28, %v28
    %v49 = vmul.f32 %v29, %v29
    %v50 = vmul.f32 %v30, %v30
    %v51 = vmul.f32 %v31, %v31
    %v52 = vmul.f32 %v32, %v32
    %v53 = vmul.f32 %v33, %v33
    %v54 = vmul.f32 %v34, %v34
    %v55 = vadd.f32 %v47, %v48
    %56 = vadd.xlane.f32.xlu0 %v55
    %v57 = vpop.xlane.xlu0 %56
    %v58 = vadd.f32 %v49, %v50
    %59 = vadd.xlane.f32.xlu0 %v58
    %v60 = vpop.xlane.xlu0 %59
    %v61 = vadd.f32 %v51, %v52
    %62 = vadd.xlane.f32.xlu0 %v61
    %v63 = vpop.xlane.xlu0 %62
    %v64 = vadd.f32 %v53, %v54
    %65 = vadd.xlane.f32.xlu0 %v64
    %v66 = vpop.xlane.xlu0 %65
    %v67 = vmul.f32 %v37, 0.00390625
    %v68 = vmul.f32 %v40, 0.00390625
    %v69 = vmul.f32 %v43, 0.00390625
    %v70 = vmul.f32 %v46, 0.00390625
    %v71 = vld [vmem:[%s4] sm:$0xff]
    %v72 = vld [vmem:[%s4 + $0x8] sm:$0xff]
    %v73 = vld [vmem:[%s1] sm:$0xff]
    %v74 = vld [vmem:[%s1 + $0x8] sm:$0xff]
    %v75 = vmul.f32 %v67, %v73
    %v76 = vmul.f32 %v68, %v74
    %v77 = vmul.f32 %v69, %v73
    %v78 = vmul.f32 %v70, %v74
    %vm79 = vcmask 7168
    %v80 = vsel %vm79, %v75, 0.0
    %v81 = vsel %vm79, %v76, 0.0
    %v82 = vadd.f32 %v80, %v81
    %v83 = vrot.slane %v82, 4
    %v84 = vadd.f32 %v82, %v83
    %v85 = vrot.slane %v84, 2
    %v86 = vadd.f32 %v84, %v85
    %v87 = vrot.slane %v86, 1
    %v88 = vadd.f32 %v86, %v87
    %v89 = vsel %vm79, %v77, 0.0
    %v90 = vsel %vm79, %v78, 0.0
    %v91 = vadd.f32 %v89, %v90
    %v92 = vrot.slane %v91, 4
    %v93 = vadd.f32 %v91, %v92
    %v94 = vrot.slane %v93, 2
    %v95 = vadd.f32 %v93, %v94
    %v96 = vrot.slane %v95, 1
    %v97 = vadd.f32 %v95, %v96
    %v98 = vld [vmem:[%s2] sm:$0x1]
    %v99 = vadd.f32 %v88, %v98
    %v100 = vadd.f32 %v97, %v98
    %vm101 = vcmp.ge.f32.partialorder %v99, 0.0
    %vm102 = vcmp.ge.f32.partialorder %v100, 0.0
    %v103 = vmul.f32 %v99, 0.01
    %v104 = vmul.f32 %v100, 0.01
    %v105 = vsel %vm101, %v99, %v103
    %v106 = vsel %vm102, %v100, %v104
    %v107 = vld [vmem:[%s3] sm:$0xff]
    %v108 = vld [vmem:[%s3 + $0x8] sm:$0xff]
    %v109 = vlaneseq
    %v110 = vshrl.u32 %v109, 7
    %v111 = vsub.s32 0, %v110
    %v112 = vrot.slane %v105, %v111
    %v113 = vlaneseq
    %v114 = vshrl.u32 %v113, 7
    %v115 = vsub.s32 0, %v114
    %v116 = vrot.slane %v106, %v115
    %v117 = vmul.f32 %v112, %v107
    %v118 = vmul.f32 %v112, %v108
    %v119 = vmul.f32 %v116, %v107
    %v120 = vmul.f32 %v116, %v108
    %v121 = vadd.f32 %v71, %v117
    %v122 = vadd.f32 %v72, %v118
    %v123 = vadd.f32 %v71, %v119
    %v124 = vadd.f32 %v72, %v120
    %s125 = scalar_lea.vmem %s1, 16
    %v126 = vld [vmem:[%s125] sm:$0xff]
    %v127 = vld [vmem:[%s125 + $0x8] sm:$0xff]
    %v128 = vmul.f32 %v67, %v126
    %v129 = vmul.f32 %v68, %v127
    %v130 = vmul.f32 %v69, %v126
    %v131 = vmul.f32 %v70, %v127
    %v132 = vsel %vm79, %v128, 0.0
    %v133 = vsel %vm79, %v129, 0.0
    %v134 = vadd.f32 %v132, %v133
    %v135 = vrot.slane %v134, 4
    %v136 = vadd.f32 %v134, %v135
    %v137 = vrot.slane %v136, 2
    %v138 = vadd.f32 %v136, %v137
    %v139 = vrot.slane %v138, 1
    %v140 = vadd.f32 %v138, %v139
    %v141 = vsel %vm79, %v130, 0.0
    %v142 = vsel %vm79, %v131, 0.0
    %v143 = vadd.f32 %v141, %v142
    %v144 = vrot.slane %v143, 4
    %v145 = vadd.f32 %v143, %v144
    %v146 = vrot.slane %v145, 2
    %v147 = vadd.f32 %v145, %v146
    %v148 = vrot.slane %v147, 1
    %v149 = vadd.f32 %v147, %v148
    %s150 = scalar_lea.vmem %s2, 1
    %v151 = vld [vmem:[%s150] sm:$0x1]
    %v152 = vadd.f32 %v140, %v151
    %v153 = vadd.f32 %v149, %v151
    %vm154 = vcmp.ge.f32.partialorder %v152, 0.0
    %vm155 = vcmp.ge.f32.partialorder %v153, 0.0
    %v156 = vmul.f32 %v152, 0.01
    %v157 = vmul.f32 %v153, 0.01
    %v158 = vsel %vm154, %v152, %v156
    %v159 = vsel %vm155, %v153, %v157
    %s160 = scalar_lea.vmem %s3, 16
    %v161 = vld [vmem:[%s160] sm:$0xff]
    %v162 = vld [vmem:[%s160 + $0x8] sm:$0xff]
    %v163 = vlaneseq
    %v164 = vshrl.u32 %v163, 7
    %v165 = vsub.s32 0, %v164
    %v166 = vrot.slane %v158, %v165
    %v167 = vlaneseq
    %v168 = vshrl.u32 %v167, 7
    %v169 = vsub.s32 0, %v168
    %v170 = vrot.slane %v159, %v169
    %v171 = vmul.f32 %v166, %v161
    %v172 = vmul.f32 %v166, %v162
    %v173 = vmul.f32 %v170, %v161
    %v174 = vmul.f32 %v170, %v162
    %v175 = vadd.f32 %v121, %v171
    %v176 = vadd.f32 %v122, %v172
    %v177 = vadd.f32 %v123, %v173
    %v178 = vadd.f32 %v124, %v174
    %v179 = vand.u32 2147483647, %v175
    %v180 = vand.u32 2147483647, %v176
    %v181 = vand.u32 2147483647, %v177
    %v182 = vand.u32 2147483647, %v178
    %v183 = vsub.f32 0.0, %v179
    %v184 = vsub.f32 0.0, %v180
    %v185 = vsub.f32 0.0, %v181
    %v186 = vsub.f32 0.0, %v182
    %v187 = vmul.f32 %v183, 1.442695
    %v188 = vpow.pop %v187
    %v189 = vmul.f32 %v184, 1.442695
    %v190 = vpow.pop %v189
    %v191 = vmul.f32 %v185, 1.442695
    %v192 = vpow.pop %v191
    %v193 = vmul.f32 %v186, 1.442695
    %v194 = vpow.pop %v193
    %vm195 = vcmp.ge.f32.partialorder %v175, 0.0
    %vm196 = vcmp.ge.f32.partialorder %v176, 0.0
    %vm197 = vcmp.ge.f32.partialorder %v177, 0.0
    %vm198 = vcmp.ge.f32.partialorder %v178, 0.0
    %v199 = vadd.f32 %v188, 1.0
    %v200 = vadd.f32 %v190, 1.0
    %v201 = vadd.f32 %v192, 1.0
    %v202 = vadd.f32 %v194, 1.0
    %v203 = vrcp.pop %v199
    %v204 = vmul.f32 1.0, %v203
    %v205 = vrcp.pop %v200
    %v206 = vmul.f32 1.0, %v205
    %v207 = vrcp.pop %v201
    %v208 = vmul.f32 1.0, %v207
    %v209 = vrcp.pop %v202
    %v210 = vmul.f32 1.0, %v209
    %v211 = vmul.f32 %v188, %v203
    %v212 = vmul.f32 %v190, %v205
    %v213 = vmul.f32 %v192, %v207
    %v214 = vmul.f32 %v194, %v209
    %v215 = vsel %vm195, %v204, %v211
    %v216 = vsel %vm196, %v206, %v212
    %v217 = vsel %vm197, %v208, %v213
    %v218 = vsel %vm198, %v210, %v214
    %v219 = vmul.f32 %v215, %v37
    %v220 = vmul.f32 %v216, %v40
    %v221 = vmul.f32 %v217, %v43
    %v222 = vmul.f32 %v218, %v46
    %v223 = vsel %vm79, %v219, 0.0
    %v224 = vsel %vm79, %v221, 0.0
    %v225 = vadd.f32 %v223, %v224
    %v226 = vsel %vm79, %v220, 0.0
    %v227 = vsel %vm79, %v222, 0.0
    %v228 = vadd.f32 %v226, %v227
    %v229 = vrcp.pop 512.0
    %v230 = vmul.f32 %v225, %v229
    %v231 = vmul.f32 %v228, %v229
    %v232 = vmul.f32 %v215, %v215
    %v233 = vmul.f32 %v216, %v216
    %v234 = vmul.f32 %v217, %v217
    %v235 = vmul.f32 %v218, %v218
    %v236 = vmul.f32 %v232, %v57
    %v237 = vmul.f32 %v233, %v60
    %v238 = vmul.f32 %v234, %v63
    %v239 = vmul.f32 %v235, %v66
    %v240 = vsel %vm79, %v236, 0.0
    %v241 = vsel %vm79, %v238, 0.0
    %v242 = vadd.f32 %v240, %v241
    %v243 = vsel %vm79, %v237, 0.0
    %v244 = vsel %vm79, %v239, 0.0
    %v245 = vadd.f32 %v243, %v244
    %v246 = vmul.f32 %v242, %v229
    %v247 = vmul.f32 %v245, %v229
    %v248 = vmul.f32 %v230, %v230
    %v249 = vmul.f32 %v231, %v231
    %v250 = vsub.f32 %v246, %v248
    %v251 = vsub.f32 %v247, %v249
    %v252 = vmax.f32 %v250, 0.0
    %v253 = vmax.f32 %v251, 0.0
    %v254 = vld [vmem:[%s5] sm:$0xff]
    %v255 = vld [vmem:[%s5 + $0x8] sm:$0xff]
    %v256 = vadd.f32 %v252, 1e-05
    %v257 = vadd.f32 %v253, 1e-05
    %v258 = vrsqrt.pop %v256
    %v259 = vrsqrt.pop %v257
    %v260 = vmul.f32 %v254, %v258
    %v261 = vmul.f32 %v255, %v259
    %v262 = vmul.f32 %v215, %v260
    %v263 = vmul.f32 %v216, %v261
    %v264 = vmul.f32 %v217, %v260
    %v265 = vmul.f32 %v218, %v261
    %v266 = vld [vmem:[%s6] sm:$0xff]
    %v267 = vld [vmem:[%s6 + $0x8] sm:$0xff]
    %v268 = vmul.f32 %v230, %v260
    %v269 = vmul.f32 %v231, %v261
    %v270 = vsub.f32 %v266, %v268
    %v271 = vsub.f32 %v267, %v269
    %273 = vset.pattern.permute.xlu0 0
    %274 = vperm.xlu0 %273, %v262
    %v275 = vpop.permute.xlu0 %274
    %278 = vset.pattern.permute.xlu0 0
    %279 = vperm.xlu0 %278, %v263
    %v280 = vpop.permute.xlu0 %279
    %283 = vset.pattern.permute.xlu0 0
    %284 = vperm.xlu0 %283, %v264
    %v285 = vpop.permute.xlu0 %284
    %288 = vset.pattern.permute.xlu0 0
    %289 = vperm.xlu0 %288, %v265
    %v290 = vpop.permute.xlu0 %289
    %v292 = vmul.f32 %v27, %v275
    %v293 = vmul.f32 %v28, %v275
    %v294 = vmul.f32 %v29, %v280
    %v295 = vmul.f32 %v30, %v280
    %v296 = vmul.f32 %v31, %v285
    %v297 = vmul.f32 %v32, %v285
    %v298 = vmul.f32 %v33, %v290
    %v299 = vmul.f32 %v34, %v290
    %301 = vset.pattern.permute.xlu0 0
    %302 = vperm.xlu0 %301, %v270
    %v303 = vpop.permute.xlu0 %302
    %306 = vset.pattern.permute.xlu0 0
    %307 = vperm.xlu0 %306, %v271
    %v308 = vpop.permute.xlu0 %307
    %v310 = vadd.f32 %v292, %v303
    %v311 = vadd.f32 %v293, %v303
    %v312 = vadd.f32 %v294, %v308
    %v313 = vadd.f32 %v295, %v308
    %v314 = vadd.f32 %v296, %v303
    %v315 = vadd.f32 %v297, %v303
    %v316 = vadd.f32 %v298, %v308
    %v317 = vadd.f32 %v299, %v308
    %vm318 = vcmp.ge.f32.partialorder %v310, 0.0
    %vm319 = vcmp.ge.f32.partialorder %v311, 0.0
    %vm320 = vcmp.ge.f32.partialorder %v312, 0.0
    %vm321 = vcmp.ge.f32.partialorder %v313, 0.0
    %vm322 = vcmp.ge.f32.partialorder %v314, 0.0
    %vm323 = vcmp.ge.f32.partialorder %v315, 0.0
    %vm324 = vcmp.ge.f32.partialorder %v316, 0.0
    %vm325 = vcmp.ge.f32.partialorder %v317, 0.0
    %v326 = vmul.f32 %v310, 0.01
    %v327 = vmul.f32 %v311, 0.01
    %v328 = vmul.f32 %v312, 0.01
    %v329 = vmul.f32 %v313, 0.01
    %v330 = vmul.f32 %v314, 0.01
    %v331 = vmul.f32 %v315, 0.01
    %v332 = vmul.f32 %v316, 0.01
    %v333 = vmul.f32 %v317, 0.01
    %v334 = vsel %vm318, %v310, %v326
    %v335 = vsel %vm319, %v311, %v327
    %v336 = vsel %vm320, %v312, %v328
    %v337 = vsel %vm321, %v313, %v329
    %v338 = vsel %vm322, %v314, %v330
    %v339 = vsel %vm323, %v315, %v331
    %v340 = vsel %vm324, %v316, %v332
    %v341 = vsel %vm325, %v317, %v333
    %342 = vst [vmem:[#allocation2] sm:$0xff] %v334
    %343 = vst [vmem:[#allocation2 + $0x8] sm:$0xff] %v335
    %344 = vst [vmem:[#allocation2 + $0x10] sm:$0xff] %v336
    %345 = vst [vmem:[#allocation2 + $0x18] sm:$0xff] %v337
    %346 = vst [vmem:[#allocation2 + $0x20] sm:$0xff] %v338
    %347 = vst [vmem:[#allocation2 + $0x28] sm:$0xff] %v339
    %348 = vst [vmem:[#allocation2 + $0x30] sm:$0xff] %v340
    %349 = vst [vmem:[#allocation2 + $0x38] sm:$0xff] %v341
    // Predicated region
    $region30: #{tpu_custom_call.1} parent=1 // pred_check
      _
    $region31: #{tpu_custom_call.1} parent=1 // pred_check_branch
      %351 = sbr.rel (0) target = $region33
    $region32: #{tpu_custom_call.1} parent=1 // pred_region
      %s353 = ssub.s32 1024, 1024
      %354 = vsyncadd [#allocation3], %s353
      %s355 = sshll.u32 [#allocation2], 4
      %s356 = int_to_ptr.vmem [resolvable:$true] %s355
      %361 = dma.vmem_to_hbm [thread:$0]  %s356, 1024, %s7, [#allocation3], 256, 256, 16
    $region33: #{tpu_custom_call.1} parent=1 // pred_fallthru
      _
    // Predicated region
    $region34: #{tpu_custom_call.1} parent=1 // pred_check
      _
    $region35: #{tpu_custom_call.1} parent=1 // pred_check_branch
      %363 = sbr.rel (0) target = $region37
    $region36: #{tpu_custom_call.1} parent=1 // pred_region
      %364 = dma.done [#allocation3], 1024
    $region37: #{tpu_custom_call.1} parent=1 // pred_fallthru
      _
    %365 = vsyncpa [#allocation3], 1

</llo_original>
